<compile_context>
chip_gen: v7x
topology: tpu7x:2x2x1
jax: 0.10.0
libtpu: 0.0.40
codegen_flags: <defaults>
</compile_context>

<pallas_src>
import functools

import jax
import jax.numpy as jnp
from jax import lax
from jax.experimental import pallas as pl
from jax.experimental.pallas import tpu as pltpu


def _ge2e_kernel(w_ref, b_ref, eT_ref, loss_ref, *, N, M):
    NM = N * M
    eT = eT_ref[...]                        # (D, NM), native dtype (f32 or bf16)
    D = eT.shape[0]
    mm_dtype = eT.dtype                     # MXU operand dtype (bf16-native if bf16 in)

    inv_M = jnp.float32(1.0 / M)
    inv_Mm1 = jnp.float32(1.0 / (M - 1))
    fM = jnp.float32(M)

    # Group one-hot masks (pure VPU iota/compare/cast, no cross-lane work).
    #   mask[k, r] = True iff row r belongs to speaker k        (N, NM) bool
    #   GtT[r, k]  = same, transposed, in the matmul dtype      (NM, N)
    k_idx = lax.broadcasted_iota(jnp.int32, (N, NM), 0)
    r_idx = lax.broadcasted_iota(jnp.int32, (N, NM), 1)
    mask = (r_idx >= k_idx * M) & (r_idx < k_idx * M + M)
    Gt = mask.astype(jnp.float32)

    r_row = lax.broadcasted_iota(jnp.int32, (NM, N), 0)
    k_col = lax.broadcasted_iota(jnp.int32, (NM, N), 1)
    GtT = ((r_row >= k_col * M) & (r_row < k_col * M + M)).astype(mm_dtype)

    # Inclusive per-speaker centroids, natural MXU orientation; scale by the
    # exact f32 1/M after the f32 accumulation (keeps the exclusive-centroid
    # expansion below exact in M).
    centT = jnp.dot(eT, GtT, preferred_element_type=jnp.float32) * inv_M    # (D, N) f32
    cent = centT.T                                    # small (D, N) -> (N, D) transpose

    # Raw e . centroid dot products, lane-dense output, natural orientation.
    Pc = jnp.dot(cent.astype(mm_dtype), eT,
                 preferred_element_type=jnp.float32)                        # (N, NM)

    # Squared norms (always f32): eT^2 is the only O(NM*D) f32 temporary.
    esq = jnp.square(eT.astype(jnp.float32))                                # (D, NM)
    ones_row = jnp.ones((1, D), jnp.float32)
    E = jnp.dot(ones_row, esq, preferred_element_type=jnp.float32)          # (1, NM)
    CC = jnp.sum(cent * cent, axis=1, keepdims=True)                        # (N, 1)

    w = w_ref[0]
    b = b_ref[0]
    b_eff = w * 1e-6 + b      # fold the reference's (cos + 1e-6) into the bias

    # Cosine to every inclusive centroid (reference clamps the norm PRODUCT);
    # the divide becomes an EUP reciprocal + VPU multiply.
    norm_e = jnp.sqrt(E)                                                    # (1, NM)
    norm_c = jnp.sqrt(CC)                                                   # (N, 1)
    cos_diff = Pc * pl.reciprocal(jnp.maximum(norm_c * norm_e, 1e-8),
                                  approx=True)                              # (N, NM)
    sim_diff = w * cos_diff + b_eff                                         # (N, NM)

    # Own-speaker (exclusive-centroid) cosine via the norm expansion:
    #   c^- = (M*c_spk - e)/(M-1),
    #   ||M*c_spk - e||^2 = M^2*||c_spk||^2 - 2M*<e,c_spk> + ||e||^2.
    PCd = jnp.sum(Gt * Pc, axis=0, keepdims=True)     # <e_r, c_spk(r)>      (1, NM)
    CCd = jnp.sum(Gt * CC, axis=0, keepdims=True)     # ||c_spk(r)||^2       (1, NM)
    num_same = (fM * PCd - E) * inv_Mm1                                      # (1, NM)
    sq_excl = jnp.maximum(fM * fM * CCd - 2.0 * fM * PCd + E, 0.0)
    norm_excl = jnp.sqrt(sq_excl) * inv_Mm1                                  # (1, NM)
    cos_same = num_same * pl.reciprocal(jnp.maximum(norm_e * norm_excl, 1e-8),
                                        approx=True)                        # (1, NM)
    sim_same = w * cos_same + b_eff                                          # (1, NM) == "pos"

    # Softmax denominator: off-diagonal exp-sum over the small speaker axis
    # (boolean mask, no (1-Gt) temporary), plus the exclusive-centroid term.
    exp_diff = jnp.exp(sim_diff)                                             # (N, NM)
    off = jnp.sum(jnp.where(mask, 0.0, exp_diff), axis=0, keepdims=True)     # (1, NM)
    neg = jnp.log(off + jnp.exp(sim_same) + 1e-6)                            # (1, NM)

    # Final lane reduce to the scalar loss.
    loss_ref[...] = jnp.sum(neg - sim_same, axis=1, keepdims=True)           # (1, 1)


@jax.jit
def ge2e_loss(embeddings, w, b):
    """embeddings: (N, M, D); w, b: scalar parameters. Returns scalar f32 loss."""
    N, M, D = embeddings.shape
    NM = N * M
    # Hand the kernel eT = (D, NM): D on sublanes, utterance-rows on the lane
    # axis (column j*M + i is utterance i of speaker j).  This single XLA-level
    # transpose removes both implicit in-kernel XLU transposes and keeps the
    # embeddings' native dtype for the HBM->VMEM DMA and the MXU operands.
    eT = jnp.transpose(embeddings, (2, 0, 1)).reshape(D, NM)
    w_arr = jnp.asarray(w, jnp.float32).reshape(1)
    b_arr = jnp.asarray(b, jnp.float32).reshape(1)

    cost = pl.CostEstimate(
        flops=2 * D * NM * N          # centroid matmul
        + 2 * N * D * NM              # e . centroid dot products
        + 2 * D * NM                  # ||e||^2 row pass
        + 20 * N * NM,                # elementwise epilogue
        transcendentals=2 * N * NM + 5 * NM,
        bytes_accessed=NM * D * embeddings.dtype.itemsize + 12,
    )

    out = pl.pallas_call(
        functools.partial(_ge2e_kernel, N=N, M=M),
        out_shape=jax.ShapeDtypeStruct((1, 1), jnp.float32),
        in_specs=[
            pl.BlockSpec(memory_space=pltpu.MemorySpace.SMEM),   # w
            pl.BlockSpec(memory_space=pltpu.MemorySpace.SMEM),   # b
            pl.BlockSpec(memory_space=pltpu.MemorySpace.VMEM),   # eT (D, NM)
        ],
        out_specs=pl.BlockSpec(memory_space=pltpu.MemorySpace.VMEM),
        compiler_params=pltpu.CompilerParams(
            # Explicit headroom above v5e's 16 MiB scoped-VMEM default in case
            # the problem is scaled up; well below physical VMEM on v5e/v6e/v7x.
            vmem_limit_bytes=32 * 1024 * 1024,
        ),
        cost_estimate=cost,
    )(w_arr, b_arr, eT)
    return out[0, 0]


def ge2e_loss_ref(embeddings, w, b):
    """Pure-JAX reference mirroring the PyTorch semantics."""
    N, M, D = embeddings.shape
    centroids = embeddings.mean(axis=1)                                   # (N, D)
    sums = embeddings.sum(axis=1)                                         # (N, D)
    c_excl = (sums[:, None, :] - embeddings) / (M - 1)                    # (N, M, D)

    def cos(x, y):
        num = jnp.sum(x * y, axis=-1)
        den = jnp.maximum(jnp.linalg.norm(x, axis=-1) * jnp.linalg.norm(y, axis=-1), 1e-8)
        return num / den

    cos_diff = cos(embeddings[:, :, None, :], centroids[None, None, :, :])  # (N, M, N)
    cos_same = cos(embeddings, c_excl)                                       # (N, M)
    eye = jnp.eye(N, dtype=bool)[:, None, :]                                 # (N, 1, N)
    cos_all = jnp.where(eye, cos_same[:, :, None], cos_diff) + 1e-6
    sim = w * cos_all + b
    pos = jnp.sum(jnp.where(eye, sim, 0.0), axis=-1)
    neg = jnp.log(jnp.exp(sim).sum(axis=-1) + 1e-6)
    return jnp.sum(neg - pos)


if __name__ == "__main__":
    key = jax.random.PRNGKey(0)
    # N speakers, M utterances per speaker, D embedding dim.
    N, M, D = 4, 5, 64
    embeddings = jax.random.normal(key, (N, M, D), dtype=jnp.float32)

    # Deterministic parameter init, exactly as in the module's __init__.
    w = jnp.float32(10.0)
    b = jnp.float32(-5.0)

    # f32 path (bit-exact matmuls; only deviation is the EUP approx-reciprocal
    # in the cosine denominators, ~1e-4-level relative per cosine).
    loss = ge2e_loss(embeddings, w, b)
    jax.block_until_ready(loss)
    ref = ge2e_loss_ref(embeddings, w, b)
    assert jnp.allclose(loss, ref, rtol=5e-3, atol=5e-3), (loss, ref)

    # bf16 inputs exercise the bf16-native MXU path (f32 accumulation, f32
    # squared norms); tolerance reflects bf16 rounding of the centroid operand.
    emb_bf16 = embeddings.astype(jnp.bfloat16)
    loss_bf16 = ge2e_loss(emb_bf16, w, b)
    jax.block_until_ready(loss_bf16)
    ref_bf16 = ge2e_loss_ref(emb_bf16.astype(jnp.float32), w, b)
    assert jnp.allclose(loss_bf16, ref_bf16, rtol=5e-2, atol=5e-2), (loss_bf16, ref_bf16)

    print("KERNEL_OK")
</pallas_src>

<mosaic_0001>
module attributes {stable_mosaic.version = 11 : i64} {
  func.func @_ge2e_kernel(%arg0: memref<1xf32, #tpu.memory_space<smem>>, %arg1: memref<1xf32, #tpu.memory_space<smem>>, %arg2: memref<64x20xf32, #tpu.memory_space<vmem>>, %arg3: memref<1x1xf32, #tpu.memory_space<vmem>>) attributes {dimension_semantics = [], scalar_prefetch = 0 : i64, scratch_operands = 0 : i64, tpu.core_type = #tpu.core_type<tc>} {
    %c0 = arith.constant 0 : index
    %c0_0 = arith.constant 0 : index
    %0 = vector.load %arg2[%c0, %c0_0] : memref<64x20xf32, #tpu.memory_space<vmem>>, vector<64x20xf32>
    %1 = tpu.iota {dimensions = array<i32: 0>} : vector<4x20xi32>
    %2 = tpu.iota {dimensions = array<i32: 1>} : vector<4x20xi32>
    %c5_i32 = arith.constant 5 : i32
    %3 = vector.broadcast %c5_i32 : i32 to vector<4x20xi32>
    %4 = arith.muli %1, %3 : vector<4x20xi32>
    %5 = arith.cmpi sge, %2, %4 : vector<4x20xi32>
    %c5_i32_1 = arith.constant 5 : i32
    %6 = vector.broadcast %c5_i32_1 : i32 to vector<4x20xi32>
    %7 = arith.muli %1, %6 : vector<4x20xi32>
    %c5_i32_2 = arith.constant 5 : i32
    %8 = vector.broadcast %c5_i32_2 : i32 to vector<4x20xi32>
    %9 = arith.addi %7, %8 : vector<4x20xi32>
    %10 = arith.cmpi slt, %2, %9 : vector<4x20xi32>
    %11 = arith.andi %5, %10 : vector<4x20xi1>
    %12 = arith.extui %11 : vector<4x20xi1> to vector<4x20xi32>
    %13 = arith.sitofp %12 : vector<4x20xi32> to vector<4x20xf32>
    %14 = tpu.iota {dimensions = array<i32: 0>} : vector<20x4xi32>
    %15 = tpu.iota {dimensions = array<i32: 1>} : vector<20x4xi32>
    %c5_i32_3 = arith.constant 5 : i32
    %16 = vector.broadcast %c5_i32_3 : i32 to vector<20x4xi32>
    %17 = arith.muli %15, %16 : vector<20x4xi32>
    %18 = arith.cmpi sge, %14, %17 : vector<20x4xi32>
    %c5_i32_4 = arith.constant 5 : i32
    %19 = vector.broadcast %c5_i32_4 : i32 to vector<20x4xi32>
    %20 = arith.muli %15, %19 : vector<20x4xi32>
    %c5_i32_5 = arith.constant 5 : i32
    %21 = vector.broadcast %c5_i32_5 : i32 to vector<20x4xi32>
    %22 = arith.addi %20, %21 : vector<20x4xi32>
    %23 = arith.cmpi slt, %14, %22 : vector<20x4xi32>
    %24 = arith.andi %18, %23 : vector<20x4xi1>
    %25 = arith.extui %24 : vector<20x4xi1> to vector<20x4xi32>
    %26 = arith.sitofp %25 : vector<20x4xi32> to vector<20x4xf32>
    %cst = arith.constant dense<0.000000e+00> : vector<64x4xf32>
    %27 = tpu.matmul %0, %26, %cst {dimension_numbers = #tpu.dot_dimension_numbers<[1], [0], [0], [1], [0, 0, 1, 1], [], []>} : vector<64x20xf32>, vector<20x4xf32>, vector<64x4xf32> -> vector<64x4xf32>
    %cst_6 = arith.constant 2.000000e-01 : f32
    %28 = vector.broadcast %cst_6 : f32 to vector<64x4xf32>
    %29 = arith.mulf %27, %28 : vector<64x4xf32>
    %30 = tpu.transpose %29, [1, 0] : vector<64x4xf32> -> vector<4x64xf32>
    %cst_7 = arith.constant dense<0.000000e+00> : vector<4x20xf32>
    %31 = tpu.matmul %30, %0, %cst_7 {dimension_numbers = #tpu.dot_dimension_numbers<[1], [0], [0], [1], [0, 0, 1, 1], [], []>} : vector<4x64xf32>, vector<64x20xf32>, vector<4x20xf32> -> vector<4x20xf32>
    %32 = arith.mulf %0, %0 : vector<64x20xf32>
    %cst_8 = arith.constant 1.000000e+00 : f32
    %33 = vector.broadcast %cst_8 : f32 to vector<1x64xf32>
    %cst_9 = arith.constant dense<0.000000e+00> : vector<1x20xf32>
    %34 = tpu.matmul %33, %32, %cst_9 {dimension_numbers = #tpu.dot_dimension_numbers<[1], [0], [0], [1], [0, 0, 1, 1], [], []>} : vector<1x64xf32>, vector<64x20xf32>, vector<1x20xf32> -> vector<1x20xf32>
    %35 = arith.mulf %30, %30 : vector<4x64xf32>
    %cst_10 = arith.constant dense<0.000000e+00> : vector<4xf32>
    %36 = vector.multi_reduction <add>, %35, %cst_10 [1] : vector<4x64xf32> to vector<4xf32>
    %37 = vector.shape_cast %36 : vector<4xf32> to vector<4x1xf32>
    %c0_11 = arith.constant 0 : index
    %38 = memref.load %arg0[%c0_11] : memref<1xf32, #tpu.memory_space<smem>>
    %c0_12 = arith.constant 0 : index
    %39 = memref.load %arg1[%c0_12] : memref<1xf32, #tpu.memory_space<smem>>
    %cst_13 = arith.constant 9.99999997E-7 : f32
    %40 = arith.mulf %38, %cst_13 : f32
    %41 = arith.addf %40, %39 : f32
    %42 = math.sqrt %34 : vector<1x20xf32>
    %43 = math.sqrt %37 : vector<4x1xf32>
    %44 = vector.broadcast %43 : vector<4x1xf32> to vector<4x20xf32>
    %45 = vector.broadcast %42 : vector<1x20xf32> to vector<4x20xf32>
    %46 = arith.mulf %44, %45 : vector<4x20xf32>
    %cst_14 = arith.constant 9.99999993E-9 : f32
    %47 = vector.broadcast %cst_14 : f32 to vector<4x20xf32>
    %48 = arith.maximumf %46, %47 : vector<4x20xf32>
    %49 = tpu.reciprocal %48 {approx = true} : vector<4x20xf32> -> vector<4x20xf32>
    %50 = arith.mulf %31, %49 : vector<4x20xf32>
    %51 = vector.broadcast %38 : f32 to vector<4x20xf32>
    %52 = arith.mulf %51, %50 : vector<4x20xf32>
    %53 = vector.broadcast %41 : f32 to vector<4x20xf32>
    %54 = arith.addf %52, %53 : vector<4x20xf32>
    %55 = arith.mulf %13, %31 : vector<4x20xf32>
    %cst_15 = arith.constant dense<0.000000e+00> : vector<20xf32>
    %56 = vector.multi_reduction <add>, %55, %cst_15 [0] : vector<4x20xf32> to vector<20xf32>
    %57 = vector.shape_cast %56 : vector<20xf32> to vector<1x20xf32>
    %58 = vector.broadcast %37 : vector<4x1xf32> to vector<4x20xf32>
    %59 = arith.mulf %13, %58 : vector<4x20xf32>
    %cst_16 = arith.constant dense<0.000000e+00> : vector<20xf32>
    %60 = vector.multi_reduction <add>, %59, %cst_16 [0] : vector<4x20xf32> to vector<20xf32>
    %61 = vector.shape_cast %60 : vector<20xf32> to vector<1x20xf32>
    %cst_17 = arith.constant 5.000000e+00 : f32
    %62 = vector.broadcast %cst_17 : f32 to vector<1x20xf32>
    %63 = arith.mulf %62, %57 : vector<1x20xf32>
    %64 = arith.subf %63, %34 : vector<1x20xf32>
    %cst_18 = arith.constant 2.500000e-01 : f32
    %65 = vector.broadcast %cst_18 : f32 to vector<1x20xf32>
    %66 = arith.mulf %64, %65 : vector<1x20xf32>
    %cst_19 = arith.constant 5.000000e+00 : f32
    %cst_20 = arith.constant 5.000000e+00 : f32
    %67 = arith.mulf %cst_19, %cst_20 : f32
    %68 = vector.broadcast %67 : f32 to vector<1x20xf32>
    %69 = arith.mulf %68, %61 : vector<1x20xf32>
    %cst_21 = arith.constant 2.000000e+00 : f32
    %cst_22 = arith.constant 5.000000e+00 : f32
    %70 = arith.mulf %cst_21, %cst_22 : f32
    %71 = vector.broadcast %70 : f32 to vector<1x20xf32>
    %72 = arith.mulf %71, %57 : vector<1x20xf32>
    %73 = arith.subf %69, %72 : vector<1x20xf32>
    %74 = arith.addf %73, %34 : vector<1x20xf32>
    %cst_23 = arith.constant 0.000000e+00 : f32
    %75 = vector.broadcast %cst_23 : f32 to vector<1x20xf32>
    %76 = arith.maximumf %74, %75 : vector<1x20xf32>
    %77 = math.sqrt %76 : vector<1x20xf32>
    %cst_24 = arith.constant 2.500000e-01 : f32
    %78 = vector.broadcast %cst_24 : f32 to vector<1x20xf32>
    %79 = arith.mulf %77, %78 : vector<1x20xf32>
    %80 = arith.mulf %42, %79 : vector<1x20xf32>
    %cst_25 = arith.constant 9.99999993E-9 : f32
    %81 = vector.broadcast %cst_25 : f32 to vector<1x20xf32>
    %82 = arith.maximumf %80, %81 : vector<1x20xf32>
    %83 = tpu.reciprocal %82 {approx = true} : vector<1x20xf32> -> vector<1x20xf32>
    %84 = arith.mulf %66, %83 : vector<1x20xf32>
    %85 = vector.broadcast %38 : f32 to vector<1x20xf32>
    %86 = arith.mulf %85, %84 : vector<1x20xf32>
    %87 = vector.broadcast %41 : f32 to vector<1x20xf32>
    %88 = arith.addf %86, %87 : vector<1x20xf32>
    %89 = math.exp %54 : vector<4x20xf32>
    %cst_26 = arith.constant 0.000000e+00 : f32
    %90 = vector.broadcast %cst_26 : f32 to vector<4x20xf32>
    %91 = arith.select %11, %90, %89 : vector<4x20xi1>, vector<4x20xf32>
    %cst_27 = arith.constant dense<0.000000e+00> : vector<20xf32>
    %92 = vector.multi_reduction <add>, %91, %cst_27 [0] : vector<4x20xf32> to vector<20xf32>
    %93 = vector.shape_cast %92 : vector<20xf32> to vector<1x20xf32>
    %94 = math.exp %88 : vector<1x20xf32>
    %95 = arith.addf %93, %94 : vector<1x20xf32>
    %cst_28 = arith.constant 9.99999997E-7 : f32
    %96 = vector.broadcast %cst_28 : f32 to vector<1x20xf32>
    %97 = arith.addf %95, %96 : vector<1x20xf32>
    %98 = math.log %97 : vector<1x20xf32>
    %99 = arith.subf %98, %88 : vector<1x20xf32>
    %cst_29 = arith.constant dense<0.000000e+00> : vector<1xf32>
    %100 = vector.multi_reduction <add>, %99, %cst_29 [1] : vector<1x20xf32> to vector<1xf32>
    %101 = vector.shape_cast %100 : vector<1xf32> to vector<1x1xf32>
    %c0_30 = arith.constant 0 : index
    %c0_31 = arith.constant 0 : index
    %102 = vector.load %arg3[%c0_30, %c0_31] : memref<1x1xf32, #tpu.memory_space<vmem>>, vector<1x1xf32>
    tpu.vector_store %arg3[%c0_30, %c0_31], %101 {strides = array<i32>} : memref<1x1xf32, #tpu.memory_space<vmem>>, vector<1x1xf32>,
    return
  }
}

</mosaic_0001>

<llo_original>
// kernel: ge2e_loss.1
$region0: #{ge2e_loss.1}
  #allocation0 [shape = 'u32[]', space=smem, size = 0x4, offset = 0x4, fixed_abs, tag = 'smem constant byte address 0x4 - core index']
  #allocation1 [shape = 'u32[144,128]{1,0:T(1,128)}', space=vmem, size = 0x12000, scoped, tag = 'internal scratch']
  #allocation2 [shape = 'f32[1]{0:T(128)S(6)}', space=smem, size = 0x200, scoped, tag = 'scoped memory for ge2e_loss.1']
  #allocation3 [shape = 'f32[1]{0:T(128)S(6)}', space=smem, size = 0x200, scoped, tag = 'scoped memory for ge2e_loss.1']
  %s0 = inlined_call_operand.<no memory space> [shape: f32[1], index: 0, kind: input, shape index: {}]
  %s1 = inlined_call_operand.<no memory space> [shape: f32[1], index: 1, kind: input, shape index: {}]
  %s2 = inlined_call_operand.vmem [shape: f32[64,20], index: 2, kind: input, shape index: {}]
  %s3 = inlined_call_operand.hbm [shape: f32[1,1], index: 3, kind: output, shape index: {}]
  %s4 = sld [smem:[#allocation0]]
  $region22: #{ge2e_loss.1} parent=0
    _
  %s6 = ssub.s32 1, %s4
  %s7 = scalar_select 0, %s6, %s4
  %8 = sst [smem:[#allocation2]] %s0
  %9 = sst [smem:[#allocation3]] %s1
  $region1: #{ge2e_loss.1} parent=0
    #allocation4 [shape = 'u8[512]{0}', space=vmem, size = 0x400, scoped, tag = 'output window, operand 0, single buffered']
    #allocation5 [shape = 's32[1]{0}', space=sflag, size = 0x4, scoped, tag = 'scoped memory for ge2e_loss.1']
    %10 = vsyncpa [#allocation5], 0
    // Predicated region
    $region2: #{ge2e_loss.1} parent=1 // pred_check
      _
    $region3: #{ge2e_loss.1} parent=1 // pred_check_branch
      %12 = sbr.rel (0) target = $region5
    $region4: #{ge2e_loss.1} parent=1 // pred_region
      _
    $region5: #{ge2e_loss.1} parent=1 // pred_fallthru
      _
    // Predicated region
    $region6: #{ge2e_loss.1} parent=1 // pred_check
      _
    $region7: #{ge2e_loss.1} parent=1 // pred_check_branch
      %14 = sbr.rel (0) target = $region9
    $region8: #{ge2e_loss.1} parent=1 // pred_region
      _
    $region9: #{ge2e_loss.1} parent=1 // pred_fallthru
      _
    // Predicated region
    $region10: #{ge2e_loss.1} parent=1 // pred_check
      _
    $region11: #{ge2e_loss.1} parent=1 // pred_check_branch
      %16 = sbr.rel (0) target = $region13
    $region12: #{ge2e_loss.1} parent=1 // pred_region
      _
    $region13: #{ge2e_loss.1} parent=1 // pred_fallthru
      _
    %v17 = vld [vmem:[%s2] sm:$0xff]
    %v18 = vld [vmem:[%s2 + $0x8] sm:$0xff]
    %v19 = vld [vmem:[%s2 + $0x10] sm:$0xff]
    %v20 = vld [vmem:[%s2 + $0x18] sm:$0xff]
    %v21 = vld [vmem:[%s2 + $0x20] sm:$0xff]
    %v22 = vld [vmem:[%s2 + $0x28] sm:$0xff]
    %v23 = vld [vmem:[%s2 + $0x30] sm:$0xff]
    %v24 = vld [vmem:[%s2 + $0x38] sm:$0xff]
    %v25 = vlaneseq
    %v26 = vshrl.u32 %v25, 7
    %v27 = vlaneseq
    %v28 = vand.u32 %v27, 127
    %v29 = vmul.u32 %v26, 5
    %vm30 = vcmp.ge.s32.totalorder %v28, %v29
    %v31 = vadd.s32 %v29, 5
    %vm32 = vcmp.lt.s32.totalorder %v28, %v31
    %vm33 = vmand %vm30, %vm32
    %v34 = vsel %vm33, 1, 0
    %v35 = vcvt.s32.f32 %v34
    %v36 = vadd.s32 %v26, 8
    %v37 = vadd.s32 %v26, 16
    %v38 = vmul.u32 %v28, 5
    %vm39 = vcmp.ge.s32.totalorder %v26, %v38
    %vm40 = vcmp.ge.s32.totalorder %v36, %v38
    %vm41 = vcmp.ge.s32.totalorder %v37, %v38
    %v42 = vadd.s32 %v38, 5
    %vm43 = vcmp.lt.s32.totalorder %v26, %v42
    %vm44 = vcmp.lt.s32.totalorder %v36, %v42
    %vm45 = vcmp.lt.s32.totalorder %v37, %v42
    %vm46 = vmand %vm39, %vm43
    %vm47 = vmand %vm40, %vm44
    %vm48 = vmand %vm41, %vm45
    %v49 = vsel %vm46, 1, 0
    %v50 = vsel %vm47, 1, 0
    %v51 = vsel %vm48, 1, 0
    %v52 = vcvt.s32.f32 %v49
    %v53 = vcvt.s32.f32 %v50
    %v54 = vcvt.s32.f32 %v51
    %vm55 = vcmask 162816
    %v57 = vsel %vm55, %v17, 0
    %v60 = vsel %vm55, %v18, 0
    %v63 = vsel %vm55, %v19, 0
    %v66 = vsel %vm55, %v20, 0
    %v69 = vsel %vm55, %v21, 0
    %v72 = vsel %vm55, %v22, 0
    %v75 = vsel %vm55, %v23, 0
    %v78 = vsel %vm55, %v24, 0
    %vm80 = vcmask 1043456
    %v82 = vsel %vm80, %v54, 0
    %84 = vmatprep.subr.mxu0 0.0
    %85 = vmatpush1.msra.mxu0 %v52
    %86 = vmatprep.subr.mxu0 0.0
    %87 = vmatpush1.msra.mxu0 %v53
    %88 = vmatprep.subr.mxu0 0.0
    %89 = vmatpush1.msra.mxu0 %v82
    %90 = vmatprep.subr.mxu0 0.0
    %91 = vmatpush1.msra.mxu0 0.0
    %92 = vmatprep.subr.mxu0 0.0
    %93 = vmatpush1.msra.mxu0 0.0
    %94 = vmatprep.subr.mxu0 0.0
    %95 = vmatpush1.msra.mxu0 0.0
    %96 = vmatprep.subr.mxu0 0.0
    %97 = vmatpush1.msra.mxu0 0.0
    %98 = vmatprep.subr.mxu0 0.0
    %99 = vmatpush1.msra.mxu0 0.0
    %100 = vmatprep.subr.mxu0 0.0
    %101 = vmatpush1.msra.mxu0 0.0
    %102 = vmatprep.subr.mxu0 0.0
    %103 = vmatpush1.msra.mxu0 0.0
    %104 = vmatprep.subr.mxu0 0.0
    %105 = vmatpush1.msra.mxu0 0.0
    %106 = vmatprep.subr.mxu0 0.0
    %107 = vmatpush1.msra.mxu0 0.0
    %108 = vmatprep.subr.mxu0 0.0
    %109 = vmatpush1.msra.mxu0 0.0
    %110 = vmatprep.subr.mxu0 0.0
    %111 = vmatpush1.msra.mxu0 0.0
    %112 = vmatprep.subr.mxu0 0.0
    %113 = vmatpush1.msra.mxu0 0.0
    %114 = vmatprep.subr.mxu0 0.0
    %115 = vmatpush1.msra.mxu0 0.0
    %116 = vmatprep.subr.mxu0 0.0
    %117 = vmatpush1.msra.mxu0 0.0
    %118 = vmatprep.subr.mxu0 0.0
    %119 = vmatpush1.msra.mxu0 0.0
    %120 = vmatprep.subr.mxu0 0.0
    %121 = vmatpush1.msra.mxu0 0.0
    %122 = vmatprep.subr.mxu0 0.0
    %123 = vmatpush1.msra.mxu0 0.0
    %124 = vmatprep.subr.mxu0 0.0
    %125 = vmatpush1.msra.mxu0 0.0
    %126 = vmatprep.subr.mxu0 0.0
    %127 = vmatpush1.msra.mxu0 0.0
    %128 = vmatprep.subr.mxu0 0.0
    %129 = vmatpush1.msra.mxu0 0.0
    %130 = vmatprep.subr.mxu0 0.0
    %131 = vmatpush1.msra.mxu0 0.0
    %132 = vmatprep.subr.mxu0 0.0
    %133 = vmatpush1.msra.mxu0 0.0
    %134 = vmatprep.subr.mxu0 0.0
    %135 = vmatpush1.msra.mxu0 0.0
    %136 = vmatprep.subr.mxu0 0.0
    %137 = vmatpush1.msra.mxu0 0.0
    %138 = vmatprep.subr.mxu0 0.0
    %139 = vmatpush1.msra.mxu0 0.0
    %140 = vmatprep.subr.mxu0 0.0
    %141 = vmatpush1.msra.mxu0 0.0
    %142 = vmatprep.subr.mxu0 0.0
    %143 = vmatpush1.msra.mxu0 0.0
    %144 = vmatprep.subr.mxu0 0.0
    %145 = vmatpush1.msra.mxu0 0.0
    %146 = vmatprep.subr.mxu0 0.0
    %147 = vmatpush1.msra.mxu0 0.0
    %148 = vmatprep.mubr.f32.mxu0 0.0
    %149 = vmatmul.mubr.f32.gmra.mrb[0].mxu0 %v57
    %v150 = vpop.f32.mrb[0].mxu0
    %v151 = vadd.f32 0.0, %v150
    %v152 = vpop.f32.mrb[0].mxu0
    %153 = vmatprep.mubr.f32.mxu0 0.0
    %154 = vmatmul.mubr.f32.gmra.mrb[0].mxu0 %v60
    %v155 = vpop.f32.mrb[0].mxu0
    %v156 = vadd.f32 0.0, %v155
    %v157 = vpop.f32.mrb[0].mxu0
    %158 = vmatprep.mubr.f32.mxu0 0.0
    %159 = vmatmul.mubr.f32.gmra.mrb[0].mxu0 %v63
    %v160 = vpop.f32.mrb[0].mxu0
    %v161 = vadd.f32 0.0, %v160
    %v162 = vpop.f32.mrb[0].mxu0
    %163 = vmatprep.mubr.f32.mxu0 0.0
    %164 = vmatmul.mubr.f32.gmra.mrb[0].mxu0 %v66
    %v165 = vpop.f32.mrb[0].mxu0
    %v166 = vadd.f32 0.0, %v165
    %v167 = vpop.f32.mrb[0].mxu0
    %168 = vmatprep.mubr.f32.mxu0 0.0
    %169 = vmatmul.mubr.f32.gmra.mrb[0].mxu0 %v69
    %v170 = vpop.f32.mrb[0].mxu0
    %v171 = vadd.f32 0.0, %v170
    %v172 = vpop.f32.mrb[0].mxu0
    %173 = vmatprep.mubr.f32.mxu0 0.0
    %174 = vmatmul.mubr.f32.gmra.mrb[0].mxu0 %v72
    %v175 = vpop.f32.mrb[0].mxu0
    %v176 = vadd.f32 0.0, %v175
    %v177 = vpop.f32.mrb[0].mxu0
    %178 = vmatprep.mubr.f32.mxu0 0.0
    %179 = vmatmul.mubr.f32.gmra.mrb[0].mxu0 %v75
    %v180 = vpop.f32.mrb[0].mxu0
    %v181 = vadd.f32 0.0, %v180
    %v182 = vpop.f32.mrb[0].mxu0
    %183 = vmatprep.mubr.f32.mxu0 0.0
    %184 = vmatmul.mubr.f32.gmra.mrb[0].mxu0 %v78
    %v185 = vpop.f32.mrb[0].mxu0
    %v186 = vadd.f32 0.0, %v185
    %v187 = vpop.f32.mrb[0].mxu0
    %188 = vdwg.mxu0
    %v189 = vmul.f32 %v151, 0.2
    %v190 = vmul.f32 %v156, 0.2
    %v191 = vmul.f32 %v161, 0.2
    %v192 = vmul.f32 %v166, 0.2
    %v193 = vmul.f32 %v171, 0.2
    %v194 = vmul.f32 %v176, 0.2
    %v195 = vmul.f32 %v181, 0.2
    %v196 = vmul.f32 %v186, 0.2
    %197 = vxpose.xlu0.b32.start [1/16] %v189, 128
    %198 = vxpose.xlu0.b32.cont [2/16] %v190, 128
    %199 = vxpose.xlu0.b32.cont [3/16] %v191, 128
    %200 = vxpose.xlu0.b32.cont [4/16] %v192, 128
    %201 = vxpose.xlu0.b32.cont [5/16] %v193, 128
    %202 = vxpose.xlu0.b32.cont [6/16] %v194, 128
    %203 = vxpose.xlu0.b32.cont [7/16] %v195, 128
    %204 = vxpose.xlu0.b32.cont [8/16] %v196, 128
    %205 = vxpose.xlu0.b32.cont [9/16] 0.0, 128
    %206 = vxpose.xlu0.b32.cont [10/16] 0.0, 128
    %207 = vxpose.xlu0.b32.cont [11/16] 0.0, 128
    %208 = vxpose.xlu0.b32.cont [12/16] 0.0, 128
    %209 = vxpose.xlu0.b32.cont [13/16] 0.0, 128
    %210 = vxpose.xlu0.b32.cont [14/16] 0.0, 128
    %211 = vxpose.xlu0.b32.cont [15/16] 0.0, 128
    %212 = vxpose.xlu0.b32.end [16/16] 0.0, 128
    %v213 = vpop.trf.xlu0
    %v214 = vpop.trf.xlu0
    %v215 = vpop.trf.xlu0
    %v216 = vpop.trf.xlu0
    %v217 = vpop.trf.xlu0
    %v218 = vpop.trf.xlu0
    %v219 = vpop.trf.xlu0
    %v220 = vpop.trf.xlu0
    %v221 = vpop.trf.xlu0
    %v222 = vpop.trf.xlu0
    %v223 = vpop.trf.xlu0
    %v224 = vpop.trf.xlu0
    %v225 = vpop.trf.xlu0
    %v226 = vpop.trf.xlu0
    %v227 = vpop.trf.xlu0
    %v228 = vpop.trf.xlu0
    %vm229 = vcmask 523264
    %v231 = vsel %vm229, %v213, 0
    %233 = vmatprep.subr.mxu0 0.0
    %234 = vmatpush1.msra.mxu0 %v17
    %235 = vmatprep.subr.mxu0 0.0
    %236 = vmatpush1.msra.mxu0 %v18
    %237 = vmatprep.subr.mxu0 0.0
    %238 = vmatpush1.msra.mxu0 %v19
    %239 = vmatprep.subr.mxu0 0.0
    %240 = vmatpush1.msra.mxu0 %v20
    %241 = vmatprep.subr.mxu0 0.0
    %242 = vmatpush1.msra.mxu0 %v21
    %243 = vmatprep.subr.mxu0 0.0
    %244 = vmatpush1.msra.mxu0 %v22
    %245 = vmatprep.subr.mxu0 0.0
    %246 = vmatpush1.msra.mxu0 %v23
    %247 = vmatprep.subr.mxu0 0.0
    %248 = vmatpush1.msra.mxu0 %v24
    %249 = vmatprep.subr.mxu0 0.0
    %250 = vmatpush1.msra.mxu0 0.0
    %251 = vmatprep.subr.mxu0 0.0
    %252 = vmatpush1.msra.mxu0 0.0
    %253 = vmatprep.subr.mxu0 0.0
    %254 = vmatpush1.msra.mxu0 0.0
    %255 = vmatprep.subr.mxu0 0.0
    %256 = vmatpush1.msra.mxu0 0.0
    %257 = vmatprep.subr.mxu0 0.0
    %258 = vmatpush1.msra.mxu0 0.0
    %259 = vmatprep.subr.mxu0 0.0
    %260 = vmatpush1.msra.mxu0 0.0
    %261 = vmatprep.subr.mxu0 0.0
    %262 = vmatpush1.msra.mxu0 0.0
    %263 = vmatprep.subr.mxu0 0.0
    %264 = vmatpush1.msra.mxu0 0.0
    %265 = vmatprep.subr.mxu0 0.0
    %266 = vmatpush1.msra.mxu0 0.0
    %267 = vmatprep.subr.mxu0 0.0
    %268 = vmatpush1.msra.mxu0 0.0
    %269 = vmatprep.subr.mxu0 0.0
    %270 = vmatpush1.msra.mxu0 0.0
    %271 = vmatprep.subr.mxu0 0.0
    %272 = vmatpush1.msra.mxu0 0.0
    %273 = vmatprep.subr.mxu0 0.0
    %274 = vmatpush1.msra.mxu0 0.0
    %275 = vmatprep.subr.mxu0 0.0
    %276 = vmatpush1.msra.mxu0 0.0
    %277 = vmatprep.subr.mxu0 0.0
    %278 = vmatpush1.msra.mxu0 0.0
    %279 = vmatprep.subr.mxu0 0.0
    %280 = vmatpush1.msra.mxu0 0.0
    %281 = vmatprep.subr.mxu0 0.0
    %282 = vmatpush1.msra.mxu0 0.0
    %283 = vmatprep.subr.mxu0 0.0
    %284 = vmatpush1.msra.mxu0 0.0
    %285 = vmatprep.subr.mxu0 0.0
    %286 = vmatpush1.msra.mxu0 0.0
    %287 = vmatprep.subr.mxu0 0.0
    %288 = vmatpush1.msra.mxu0 0.0
    %289 = vmatprep.subr.mxu0 0.0
    %290 = vmatpush1.msra.mxu0 0.0
    %291 = vmatprep.subr.mxu0 0.0
    %292 = vmatpush1.msra.mxu0 0.0
    %293 = vmatprep.subr.mxu0 0.0
    %294 = vmatpush1.msra.mxu0 0.0
    %295 = vmatprep.subr.mxu0 0.0
    %296 = vmatpush1.msra.mxu0 0.0
    %297 = vmatprep.mubr.f32.mxu0 0.0
    %298 = vmatmul.mubr.f32.gmra.mrb[0].mxu0 %v231
    %v299 = vpop.f32.mrb[0].mxu0
    %v300 = vadd.f32 0.0, %v299
    %v301 = vpop.f32.mrb[0].mxu0
    %302 = vdwg.mxu0
    %v303 = vmul.f32 %v17, %v17
    %v304 = vmul.f32 %v18, %v18
    %v305 = vmul.f32 %v19, %v19
    %v306 = vmul.f32 %v20, %v20
    %v307 = vmul.f32 %v21, %v21
    %v308 = vmul.f32 %v22, %v22
    %v309 = vmul.f32 %v23, %v23
    %v310 = vmul.f32 %v24, %v24
    %v312 = vsel %vm229, 1.0, 0
    %314 = vmatprep.subr.mxu0 0.0
    %315 = vmatpush1.msra.mxu0 %v303
    %316 = vmatprep.subr.mxu0 0.0
    %317 = vmatpush1.msra.mxu0 %v304
    %318 = vmatprep.subr.mxu0 0.0
    %319 = vmatpush1.msra.mxu0 %v305
    %320 = vmatprep.subr.mxu0 0.0
    %321 = vmatpush1.msra.mxu0 %v306
    %322 = vmatprep.subr.mxu0 0.0
    %323 = vmatpush1.msra.mxu0 %v307
    %324 = vmatprep.subr.mxu0 0.0
    %325 = vmatpush1.msra.mxu0 %v308
    %326 = vmatprep.subr.mxu0 0.0
    %327 = vmatpush1.msra.mxu0 %v309
    %328 = vmatprep.subr.mxu0 0.0
    %329 = vmatpush1.msra.mxu0 %v310
    %330 = vmatprep.subr.mxu0 0.0
    %331 = vmatpush1.msra.mxu0 0.0
    %332 = vmatprep.subr.mxu0 0.0
    %333 = vmatpush1.msra.mxu0 0.0
    %334 = vmatprep.subr.mxu0 0.0
    %335 = vmatpush1.msra.mxu0 0.0
    %336 = vmatprep.subr.mxu0 0.0
    %337 = vmatpush1.msra.mxu0 0.0
    %338 = vmatprep.subr.mxu0 0.0
    %339 = vmatpush1.msra.mxu0 0.0
    %340 = vmatprep.subr.mxu0 0.0
    %341 = vmatpush1.msra.mxu0 0.0
    %342 = vmatprep.subr.mxu0 0.0
    %343 = vmatpush1.msra.mxu0 0.0
    %344 = vmatprep.subr.mxu0 0.0
    %345 = vmatpush1.msra.mxu0 0.0
    %346 = vmatprep.subr.mxu0 0.0
    %347 = vmatpush1.msra.mxu0 0.0
    %348 = vmatprep.subr.mxu0 0.0
    %349 = vmatpush1.msra.mxu0 0.0
    %350 = vmatprep.subr.mxu0 0.0
    %351 = vmatpush1.msra.mxu0 0.0
    %352 = vmatprep.subr.mxu0 0.0
    %353 = vmatpush1.msra.mxu0 0.0
    %354 = vmatprep.subr.mxu0 0.0
    %355 = vmatpush1.msra.mxu0 0.0
    %356 = vmatprep.subr.mxu0 0.0
    %357 = vmatpush1.msra.mxu0 0.0
    %358 = vmatprep.subr.mxu0 0.0
    %359 = vmatpush1.msra.mxu0 0.0
    %360 = vmatprep.subr.mxu0 0.0
    %361 = vmatpush1.msra.mxu0 0.0
    %362 = vmatprep.subr.mxu0 0.0
    %363 = vmatpush1.msra.mxu0 0.0
    %364 = vmatprep.subr.mxu0 0.0
    %365 = vmatpush1.msra.mxu0 0.0
    %366 = vmatprep.subr.mxu0 0.0
    %367 = vmatpush1.msra.mxu0 0.0
    %368 = vmatprep.subr.mxu0 0.0
    %369 = vmatpush1.msra.mxu0 0.0
    %370 = vmatprep.subr.mxu0 0.0
    %371 = vmatpush1.msra.mxu0 0.0
    %372 = vmatprep.subr.mxu0 0.0
    %373 = vmatpush1.msra.mxu0 0.0
    %374 = vmatprep.subr.mxu0 0.0
    %375 = vmatpush1.msra.mxu0 0.0
    %376 = vmatprep.subr.mxu0 0.0
    %377 = vmatpush1.msra.mxu0 0.0
    %378 = vmatprep.mubr.f32.mxu0 0.0
    %379 = vmatmul.mubr.f32.gmra.mrb[0].mxu0 %v312
    %v380 = vpop.f32.mrb[0].mxu0
    %v381 = vadd.f32 0.0, %v380
    %v382 = vpop.f32.mrb[0].mxu0
    %383 = vdwg.mxu0
    %v384 = vmul.f32 %v213, %v213
    %vm385 = vcmask 519168
    %v386 = vsel %vm385, %v384, 0.0
    %387 = vadd.xlane.f32.xlu0 %v386
    %v388 = vpop.xlane.xlu0 %387
    %s389 = sld [smem:[#allocation2]]
    %s390 = sld [smem:[#allocation3]]
    %s391 = smul.f32 %s389, 1e-06
    %s392 = sadd.f32 %s391, %s390
    %v393 = vrsqrt.pop %v381
    %v394 = vmul.f32 %v381, %v393
    %vm395 = vcmp.eq.f32.partialorder %v381, inf
    %v396 = vsel %vm395, %v381, %v394
    %vm397 = vcmp.eq.f32.partialorder %v381, 0.0
    %v398 = vand.u32 %v381, 2147483648
    %v399 = vsel %vm397, %v398, %v396
    %v400 = vrsqrt.pop %v388
    %v401 = vmul.f32 %v388, %v400
    %vm402 = vcmp.eq.f32.partialorder %v388, inf
    %v403 = vsel %vm402, %v388, %v401
    %vm404 = vcmp.eq.f32.partialorder %v388, 0.0
    %v405 = vand.u32 %v388, 2147483648
    %v406 = vsel %vm404, %v405, %v403
    %v407 = vlaneseq
    %v408 = vshrl.u32 %v407, 7
    %v409 = vsub.s32 0, %v408
    %v410 = vrot.slane %v399, %v409
    %v411 = vmul.f32 %v406, %v410
    %v412 = vmax.f32 %v411, 1e-08
    %v413 = vrcp.pop %v412
    %v414 = vmul.f32 %v300, %v413
    %v415 = vstv %s389
    %v416 = vmul.f32 %v415, %v414
    %v417 = vstv %s392
    %v418 = vadd.f32 %v416, %v417
    %v419 = vmul.f32 %v35, %v300
    %vm420 = vcmask 158720
    %v421 = vsel %vm420, %v419, 0.0
    %v422 = vrot.slane %v421, 4
    %v423 = vadd.f32 %v421, %v422
    %v424 = vrot.slane %v423, 2
    %v425 = vadd.f32 %v423, %v424
    %v426 = vrot.slane %v425, 1
    %v427 = vadd.f32 %v425, %v426
    %v428 = vmul.f32 %v35, %v388
    %v429 = vsel %vm420, %v428, 0.0
    %v430 = vrot.slane %v429, 4
    %v431 = vadd.f32 %v429, %v430
    %v432 = vrot.slane %v431, 2
    %v433 = vadd.f32 %v431, %v432
    %v434 = vrot.slane %v433, 1
    %v435 = vadd.f32 %v433, %v434
    %v436 = vmul.f32 %v427, 5.0
    %v437 = vsub.f32 %v436, %v381
    %v438 = vmul.f32 %v437, 0.25
    %v439 = vmul.f32 %v435, 25.0
    %v440 = vmul.f32 %v427, 10.0
    %v441 = vsub.f32 %v439, %v440
    %v442 = vadd.f32 %v441, %v381
    %v443 = vmax.f32 %v442, 0.0
    %v444 = vrsqrt.pop %v443
    %v445 = vmul.f32 %v443, %v444
    %vm446 = vcmp.eq.f32.partialorder %v443, inf
    %v447 = vsel %vm446, %v443, %v445
    %vm448 = vcmp.eq.f32.partialorder %v443, 0.0
    %v449 = vand.u32 %v443, 2147483648
    %v450 = vsel %vm448, %v449, %v447
    %v451 = vmul.f32 %v450, 0.25
    %v452 = vmul.f32 %v399, %v451
    %v453 = vmax.f32 %v452, 1e-08
    %v454 = vrcp.pop %v453
    %v455 = vmul.f32 %v438, %v454
    %v456 = vmul.f32 %v415, %v455
    %v457 = vadd.f32 %v456, %v417
    %v458 = vmul.f32 %v418, 1.442695
    %v459 = vpow.pop %v458
    %v460 = vsel %vm33, 0.0, %v459
    %v461 = vsel %vm420, %v460, 0.0
    %v462 = vrot.slane %v461, 4
    %v463 = vadd.f32 %v461, %v462
    %v464 = vrot.slane %v463, 2
    %v465 = vadd.f32 %v463, %v464
    %v466 = vrot.slane %v465, 1
    %v467 = vadd.f32 %v465, %v466
    %v468 = vmul.f32 %v457, 1.442695
    %v469 = vpow.pop %v468
    %v470 = vadd.f32 %v467, %v469
    %v471 = vadd.f32 %v470, 1e-06
    %v472 = vlog2.pop %v471
    %v473 = vmul.f32 %v472, 0.6931472
    %v474 = vsub.f32 %v473, %v457
    %vm475 = vcmask 155648
    %v476 = vsel %vm475, %v474, 0.0
    %477 = vadd.xlane.f32.xlu0 %v476
    %v478 = vpop.xlane.xlu0 %477
    %vm479 = vcmask 0
    %480 = vst.msk [vmem:[#allocation4] sm:$0x1] %vm479, %v478
    // Predicated region
    $region14: #{ge2e_loss.1} parent=1 // pred_check
      _
    $region15: #{ge2e_loss.1} parent=1 // pred_check_branch
      %482 = sbr.rel (0) target = $region17
    $region16: #{ge2e_loss.1} parent=1 // pred_region
      %s484 = ssub.s32 16, 16
      %485 = vsyncadd [#allocation5], %s484
      %s487 = sshll.u32 [#allocation4], 4
      %s488 = int_to_ptr.vmem [resolvable:$true] %s487
      %490 = dma.vmem_to_hbm [thread:$0]  %s488, 16, %s3, [#allocation5]
    $region17: #{ge2e_loss.1} parent=1 // pred_fallthru
      _
    // Predicated region
    $region18: #{ge2e_loss.1} parent=1 // pred_check
      _
    $region19: #{ge2e_loss.1} parent=1 // pred_check_branch
      %492 = sbr.rel (0) target = $region21
    $region20: #{ge2e_loss.1} parent=1 // pred_region
      %493 = dma.done [#allocation5], 16
    $region21: #{ge2e_loss.1} parent=1 // pred_fallthru
      _
    %494 = vsyncpa [#allocation5], 1

</llo_original>
